<compile_context>
chip_gen: v6e
topology: v6e:2x2x1
jax: 0.10.0
libtpu: 0.0.40
codegen_flags: <defaults>
</compile_context>

<pallas_src>
import jax
import jax.numpy as jnp
from jax.experimental import pallas as pl
from jax.experimental.pallas import tpu as pltpu


def _aconc_elemwise_kernel(coef_ref, x_ref, o_ref):
    # coef block: (Nb, TC, 3) f32 with per-(n, c) columns [gh, a, c]
    # x block:    (Nb, TC, T) -> out = x * (a * tanh(gh * x) + c)
    #                              == (p1-p2)*x*sigmoid(beta*(p1-p2)*x) + p2*x
    x = x_ref[...].astype(jnp.float32)           # (Nb, TC, T)
    coef = coef_ref[...]                         # (Nb, TC, 3)
    gh = coef[:, :, 0:1]                         # (Nb, TC, 1) broadcasts over lanes
    a = coef[:, :, 1:2]
    c = coef[:, :, 2:3]
    t = jnp.tanh(gh * x)                         # single transcendental / element
    o_ref[...] = (x * (a * t + c)).astype(o_ref.dtype)


def _round_up(a, b):
    return ((a + b - 1) // b) * b


def _select_tiles(N, C, HW, itemsize,
                  target_bytes=8 << 20, min_step_bytes=256 << 10):
    """Pick block dims (Nb, TC, T): T mult of 128, TC mult of 8 (or == C)."""
    hw128 = _round_up(HW, 128)
    T = min(1024, hw128)

    # Channel tiling only for wide, 8-aligned channel counts.
    TC = min(C, 512) if (C % 8 == 0) else C

    def vmem_bytes(nb, tc, t):
        # x-in + out, double-buffered, plus the (lane-padded) coef slab.
        return 2 * 2 * nb * tc * t * itemsize + 2 * nb * _round_up(tc, 8) * 128 * 4

    # Shrink T first (keep >= 512 lanes if possible), then TC, then T again.
    while vmem_bytes(1, TC, T) > target_bytes and T > 512:
        T -= 128
    while vmem_bytes(1, TC, T) > target_bytes and C % 8 == 0 and TC > 8:
        TC = max(8, _round_up(TC // 2, 8))
    while vmem_bytes(1, TC, T) > target_bytes and T > 128:
        T -= 128

    # Small-spatial layers: fold batch items per step so each grid step moves
    # a reasonable payload (per-step overhead ~0.35 us).
    Nb = 1
    if T >= hw128 and TC >= C:
        while (Nb < N
               and Nb * C * T * itemsize < min_step_bytes
               and vmem_bytes(2 * Nb, TC, T) <= target_bytes):
            Nb *= 2
        Nb = min(Nb, N)
    return Nb, TC, T


def meta_aconc(x_nchw, w1, w2, p1, p2, *, donate_x=False):
    """MetaAconC forward.

    x_nchw: (N, C, H, W); w1: (r, C) fc1 weight; w2: (C, r) fc2 weight;
    p1, p2: (C,). Returns (N, C, H, W) in x dtype.
    """
    N, C, H, W = x_nchw.shape
    HW = H * W
    itemsize = jnp.dtype(x_nchw.dtype).itemsize

    # ---- beta per (N, C): hoisted out of the kernel (negligible flops) ----
    # Fused f32 reduction: no f32 materialization of x for low-precision input.
    m = jnp.mean(x_nchw, axis=(2, 3), dtype=jnp.float32)    # (N, C) global avg pool
    h = m @ w1.astype(jnp.float32).T                        # (N, r)  fc1 (1x1 conv, no bias)
    b = h @ w2.astype(jnp.float32).T                        # (N, C)  fc2 (1x1 conv, no bias)
    beta = jax.nn.sigmoid(b)                                # (N, C)

    # ---- fold per-channel constants for the streaming pass ----
    p1f = p1.astype(jnp.float32)
    p2f = p2.astype(jnp.float32)
    d12 = p1f - p2f                                         # (C,)
    gh = 0.5 * beta * d12[None, :]                          # (N, C)
    a = jnp.broadcast_to(0.5 * d12, (N, C))
    c = jnp.broadcast_to(0.5 * d12 + p2f, (N, C))
    coef = jnp.stack([gh, a, c], axis=-1)                   # (N, C, 3) f32

    # ---- VMEM-budgeted, lane-aligned tiling (no pad, ragged tiles masked) ----
    x = x_nchw.reshape(N, C, HW)
    Nb, TC, T = _select_tiles(N, C, HW, itemsize)
    grid = (pl.cdiv(N, Nb), pl.cdiv(C, TC), pl.cdiv(HW, T))

    out = pl.pallas_call(
        _aconc_elemwise_kernel,
        out_shape=jax.ShapeDtypeStruct((N, C, HW), x_nchw.dtype),
        grid_spec=pltpu.PrefetchScalarGridSpec(
            num_scalar_prefetch=0,
            grid=grid,
            in_specs=[
                # tiny per-(n, c) coefficients: constant block index along the
                # inner HW axis -> stays VMEM-resident, no per-tile re-DMA.
                pl.BlockSpec((Nb, TC, 3), lambda n, ci, j: (n, ci, 0)),
                # activation tile, lane-dense (T multiple of 128)
                pl.BlockSpec((Nb, TC, T), lambda n, ci, j: (n, ci, j)),
            ],
            out_specs=pl.BlockSpec((Nb, TC, T), lambda n, ci, j: (n, ci, j)),
        ),
        compiler_params=pltpu.CompilerParams(
            dimension_semantics=("parallel", "parallel", "parallel"),
            vmem_limit_bytes=32 << 20,      # explicit, with headroom; safe on v5e/v6e/v7x
        ),
        cost_estimate=pl.CostEstimate(
            flops=4 * N * C * HW,
            transcendentals=N * C * HW,
            bytes_accessed=2 * N * C * HW * itemsize + N * C * 3 * 4,
        ),
        # Donate x into the output when the caller no longer needs it.
        input_output_aliases=({1: 0} if donate_x else {}),
    )(coef, x)

    return out.reshape(N, C, H, W)


def meta_aconc_ref(x, w1, w2, p1, p2):
    """Pure-JAX reference matching the PyTorch forward."""
    N, C, H, W = x.shape
    m = x.mean(axis=2, keepdims=True).mean(axis=3, keepdims=True)     # (N,C,1,1)
    h = jnp.einsum('rc,nchw->nrhw', w1, m)                            # fc1 (1x1 conv)
    b = jnp.einsum('cr,nrhw->nchw', w2, h)                            # fc2 (1x1 conv)
    beta = jax.nn.sigmoid(b)                                          # (N,C,1,1)
    p1b = p1.reshape(1, C, 1, 1)
    p2b = p2.reshape(1, C, 1, 1)
    d = p1b * x - p2b * x
    return d * jax.nn.sigmoid(beta * d) + p2b * x


if __name__ == "__main__":
    # width=4  =>  fc1: Conv2d(4, max(4//16,4)=4, 1x1), fc2: Conv2d(4, 4, 1x1)
    N, C, H, W = 2, 4, 16, 16
    r = max(C // 16, 4)

    key = jax.random.PRNGKey(0)
    kx, kw1, kw2, kp1, kp2 = jax.random.split(key, 5)

    x = jax.random.normal(kx, (N, C, H, W), dtype=jnp.float32)
    # Deterministic synthetic parameters (module __init__ shapes).
    w1 = jax.random.normal(kw1, (r, C), dtype=jnp.float32) * 0.5   # fc1.weight (r,C,1,1) squeezed
    w2 = jax.random.normal(kw2, (C, r), dtype=jnp.float32) * 0.5   # fc2.weight (C,r,1,1) squeezed
    p1 = jax.random.normal(kp1, (C,), dtype=jnp.float32)           # torch.randn(1,C,1,1)
    p2 = jax.random.normal(kp2, (C,), dtype=jnp.float32)

    ref = meta_aconc_ref(x, w1, w2, p1, p2)

    out = meta_aconc(x, w1, w2, p1, p2)
    out = jax.block_until_ready(out)

    assert out.shape == (N, C, H, W)
    assert jnp.allclose(out, ref, atol=1e-5, rtol=1e-5), "mismatch vs reference"

    print("KERNEL_OK")
</pallas_src>

<mosaic_0001>
module attributes {stable_mosaic.version = 11 : i64} {
  func.func @_aconc_elemwise_kernel(%arg0: i32, %arg1: i32, %arg2: i32, %arg3: memref<2x4x3xf32, #tpu.memory_space<vmem>>, %arg4: memref<2x4x256xf32, #tpu.memory_space<vmem>>, %arg5: memref<2x4x256xf32, #tpu.memory_space<vmem>>) attributes {dimension_semantics = [#tpu.dimension_semantics<parallel>, #tpu.dimension_semantics<parallel>, #tpu.dimension_semantics<parallel>], iteration_bounds = array<i64: 1, 1, 1>, scalar_prefetch = 0 : i64, scratch_operands = 0 : i64, tpu.core_type = #tpu.core_type<tc>, window_params = [{transform_indices = @transform_0, window_bounds = array<i64: 2, 4, 3>}, {transform_indices = @transform_1, window_bounds = array<i64: 2, 4, 256>}, {transform_indices = @transform_2, window_bounds = array<i64: 2, 4, 256>}]} {
    %c0 = arith.constant 0 : index
    %c0_0 = arith.constant 0 : index
    %c0_1 = arith.constant 0 : index
    %0 = vector.load %arg4[%c0, %c0_0, %c0_1] : memref<2x4x256xf32, #tpu.memory_space<vmem>>, vector<2x4x256xf32>
    %c0_2 = arith.constant 0 : index
    %c0_3 = arith.constant 0 : index
    %c0_4 = arith.constant 0 : index
    %1 = vector.load %arg3[%c0_2, %c0_3, %c0_4] : memref<2x4x3xf32, #tpu.memory_space<vmem>>, vector<2x4x3xf32>
    %2 = vector.extract_strided_slice %1 {offsets = [0, 0, 0], sizes = [2, 4, 1], strides = [1, 1, 1]} : vector<2x4x3xf32> to vector<2x4x1xf32>
    %3 = vector.extract_strided_slice %1 {offsets = [0, 0, 1], sizes = [2, 4, 1], strides = [1, 1, 1]} : vector<2x4x3xf32> to vector<2x4x1xf32>
    %4 = vector.extract_strided_slice %1 {offsets = [0, 0, 2], sizes = [2, 4, 1], strides = [1, 1, 1]} : vector<2x4x3xf32> to vector<2x4x1xf32>
    %5 = vector.broadcast %2 : vector<2x4x1xf32> to vector<2x4x256xf32>
    %6 = arith.mulf %5, %0 : vector<2x4x256xf32>
    %7 = math.tanh %6 : vector<2x4x256xf32>
    %8 = vector.broadcast %3 : vector<2x4x1xf32> to vector<2x4x256xf32>
    %9 = arith.mulf %8, %7 : vector<2x4x256xf32>
    %10 = vector.broadcast %4 : vector<2x4x1xf32> to vector<2x4x256xf32>
    %11 = arith.addf %9, %10 : vector<2x4x256xf32>
    %12 = arith.mulf %0, %11 : vector<2x4x256xf32>
    %c0_5 = arith.constant 0 : index
    %c0_6 = arith.constant 0 : index
    %c0_7 = arith.constant 0 : index
    %13 = vector.load %arg5[%c0_5, %c0_6, %c0_7] : memref<2x4x256xf32, #tpu.memory_space<vmem>>, vector<2x4x256xf32>
    tpu.vector_store %arg5[%c0_5, %c0_6, %c0_7], %12 {strides = array<i32>} : memref<2x4x256xf32, #tpu.memory_space<vmem>>, vector<2x4x256xf32>,
    return
  }
  func.func @transform_0(%arg0: i32, %arg1: i32, %arg2: i32) -> (i32, i32, i32) {
    %c0_i32 = arith.constant 0 : i32
    %c0_i32_0 = arith.constant 0 : i32
    return %arg0, %arg1, %c0_i32 : i32, i32, i32
  }
  func.func @transform_1(%arg0: i32, %arg1: i32, %arg2: i32) -> (i32, i32, i32) {
    %c0_i32 = arith.constant 0 : i32
    return %arg0, %arg1, %arg2 : i32, i32, i32
  }
  func.func @transform_2(%arg0: i32, %arg1: i32, %arg2: i32) -> (i32, i32, i32) {
    %c0_i32 = arith.constant 0 : i32
    return %arg0, %arg1, %arg2 : i32, i32, i32
  }
}

</mosaic_0001>

<llo_original>
// kernel: tpu_custom_call.1
$region0: #{tpu_custom_call.1}
  #allocation0 [shape = 'u32[]', space=smem, size = 0x4, offset = 0x4, fixed_abs, tag = 'smem constant byte address 0x4 - core index']
  #allocation1 [shape = 'u32[144,128]{1,0:T(1,128)}', space=vmem, size = 0x12000, scoped, tag = 'internal scratch']
  %s0 = inlined_call_operand.vmem [shape: f32[2,4,3], index: 0, kind: input, shape index: {}]
  %s1 = inlined_call_operand.hbm [shape: f32[2,4,256], index: 1, kind: input, shape index: {}]
  %s2 = inlined_call_operand.hbm [shape: f32[2,4,256], index: 2, kind: output, shape index: {}]
  %s3 = sld [smem:[#allocation0]]
  $region22: #{tpu_custom_call.1} parent=0
    _
  %s5 = ssub.s32 1, %s3
  %s6 = scalar_select 0, %s5, %s3
  $region1: #{tpu_custom_call.1} parent=0
    #allocation2 [shape = 'u8[8192]{0}', space=vmem, size = 0x2000, scoped, tag = 'input window, operand 1, single buffered']
    #allocation3 [shape = 's32[1]{0}', space=sflag, size = 0x4, scoped, tag = 'scoped memory for tpu_custom_call.1']
    #allocation4 [shape = 's32[1]{0}', space=sflag, size = 0x4, scoped, tag = 'scoped memory for tpu_custom_call.1']
    #allocation5 [shape = 'u8[8192]{0}', space=vmem, size = 0x2000, scoped, tag = 'output window, operand 0, single buffered']
    %7 = vsyncpa [#allocation3], 0
    %8 = vsyncpa [#allocation4], 0
    // Predicated region
    $region2: #{tpu_custom_call.1} parent=1 // pred_check
      _
    $region3: #{tpu_custom_call.1} parent=1 // pred_check_branch
      %10 = sbr.rel (0) target = $region5
    $region4: #{tpu_custom_call.1} parent=1 // pred_region
      _
    $region5: #{tpu_custom_call.1} parent=1 // pred_fallthru
      _
    // Predicated region
    $region6: #{tpu_custom_call.1} parent=1 // pred_check
      _
    $region7: #{tpu_custom_call.1} parent=1 // pred_check_branch
      %12 = sbr.rel (0) target = $region9
    $region8: #{tpu_custom_call.1} parent=1 // pred_region
      %s14 = ssub.s32 256, 256
      %15 = vsyncadd [#allocation3], %s14
      %s16 = sshll.u32 [#allocation2], 4
      %s17 = int_to_ptr.vmem [resolvable:$true] %s16
      %22 = dma.hbm_to_vmem [thread:$0]  %s1, 256, %s17, [#allocation3], 128, 128, 8
    $region9: #{tpu_custom_call.1} parent=1 // pred_fallthru
      _
    // Predicated region
    $region10: #{tpu_custom_call.1} parent=1 // pred_check
      _
    $region11: #{tpu_custom_call.1} parent=1 // pred_check_branch
      %24 = sbr.rel (0) target = $region13
    $region12: #{tpu_custom_call.1} parent=1 // pred_region
      %25 = dma.done [#allocation3], 256
    $region13: #{tpu_custom_call.1} parent=1 // pred_fallthru
      _
    %v26 = vld [vmem:[#allocation2] sm:$0xff]
    %v27 = vld [vmem:[#allocation2 + $0x8] sm:$0xff]
    %v28 = vld [vmem:[%s0] sm:$0xf]
    %v29 = vld [vmem:[%s0 + $0x4] sm:$0xf]
    %31 = vset.pattern.permute.xlu0 0
    %32 = vperm.xlu0 %31, %v28
    %v33 = vpop.permute.xlu0 %32
    %36 = vset.pattern.permute.xlu0 0
    %37 = vperm.xlu0 %36, %v29
    %v38 = vpop.permute.xlu0 %37
    %v42 = vcombine.high %v26, %v26
    %v43 = vcombine.high %v27, %v27
    %v46 = vmul.f32 %v33, %v26
    %v47 = vmul.f32 %v33, %v42
    %v48 = vmul.f32 %v38, %v27
    %v49 = vmul.f32 %v38, %v43
    %v50 = vtanh.pop %v46
    %v51 = vtanh.pop %v47
    %v52 = vtanh.pop %v48
    %v53 = vtanh.pop %v49
    %54 = vset.pattern.permute.xlu0 1
    %55 = vperm.xlu0 %54, %v28
    %v56 = vpop.permute.xlu0 %55
    %58 = vset.pattern.permute.xlu0 1
    %59 = vperm.xlu0 %58, %v29
    %v60 = vpop.permute.xlu0 %59
    %v62 = vmul.f32 %v56, %v50
    %v63 = vmul.f32 %v56, %v51
    %v64 = vmul.f32 %v60, %v52
    %v65 = vmul.f32 %v60, %v53
    %66 = vset.pattern.permute.xlu0 2
    %67 = vperm.xlu0 %66, %v28
    %v68 = vpop.permute.xlu0 %67
    %70 = vset.pattern.permute.xlu0 2
    %71 = vperm.xlu0 %70, %v29
    %v72 = vpop.permute.xlu0 %71
    %v74 = vadd.f32 %v62, %v68
    %v75 = vadd.f32 %v63, %v68
    %v76 = vadd.f32 %v64, %v72
    %v77 = vadd.f32 %v65, %v72
    %v82 = vcombine.low %v74, %v75
    %v83 = vcombine.low %v76, %v77
    %v86 = vmul.f32 %v26, %v82
    %v87 = vmul.f32 %v27, %v83
    %88 = vst [vmem:[#allocation5] sm:$0xff] %v86
    %89 = vst [vmem:[#allocation5 + $0x8] sm:$0xff] %v87
    // Predicated region
    $region14: #{tpu_custom_call.1} parent=1 // pred_check
      _
    $region15: #{tpu_custom_call.1} parent=1 // pred_check_branch
      %91 = sbr.rel (0) target = $region17
    $region16: #{tpu_custom_call.1} parent=1 // pred_region
      %s93 = ssub.s32 256, 256
      %94 = vsyncadd [#allocation4], %s93
      %s95 = sshll.u32 [#allocation5], 4
      %s96 = int_to_ptr.vmem [resolvable:$true] %s95
      %101 = dma.vmem_to_hbm [thread:$0]  %s96, 256, %s2, [#allocation4], 128, 128, 8
    $region17: #{tpu_custom_call.1} parent=1 // pred_fallthru
      _
    // Predicated region
    $region18: #{tpu_custom_call.1} parent=1 // pred_check
      _
    $region19: #{tpu_custom_call.1} parent=1 // pred_check_branch
      %103 = sbr.rel (0) target = $region21
    $region20: #{tpu_custom_call.1} parent=1 // pred_region
      %104 = dma.done [#allocation4], 256
    $region21: #{tpu_custom_call.1} parent=1 // pred_fallthru
      _
    %105 = vsyncpa [#allocation3], 1
    %106 = vsyncpa [#allocation4], 1

</llo_original>
